<compile_context>
chip_gen: v5e
topology: v5e:2x2
jax: 0.10.0
libtpu: 0.0.40
codegen_flags: <defaults>
</compile_context>

<pallas_src>
import jax
import jax.numpy as jnp
from jax.experimental import pallas as pl
from jax.experimental.pallas import tpu as pltpu


def spatial_bn_kernel(off_ref, scale_ref, x_ref, noise_ref,
                      o_ref, mean_ref, std_ref):
    x = x_ref[...]                                    # (N, Ct, Ts) f32
    n = x.shape[0]

    # Batch mean (torch: X.mean(dim=0)) and unbiased std (torch.std) + 1e-8.
    m = jnp.mean(x, axis=0, keepdims=True)            # (1, Ct, Ts)
    d = x - m                                         # dies right after the sum
    var = jnp.sum(d * d, axis=0, keepdims=True) * (1.0 / (n - 1))
    s = jnp.sqrt(var) + 1e-8                          # (1, Ct, Ts)
    inv_s = 1.0 / s                                   # exact (approx recip would
                                                      # break the 1e-4 tolerance)

    off = off_ref[...][None]                          # (1, Ct, 1)
    sc = scale_ref[...][None]                         # (1, Ct, 1)

    # out = off + sc * (x + 0.05*s*noise - m) / s  ==  a*x + b
    a = sc * inv_s                                    # (1, Ct, Ts)
    b = off + 0.05 * sc * noise_ref[...] - a * m      # mean folded into bias

    o_ref[...] = a * x + b                            # broadcast over batch
    mean_ref[...] = m
    std_ref[...] = s


def _footprint_bytes(N, c_tile, tile_s):
    """Approximate VMEM footprint of one pipelined grid step."""
    blk = 4 * c_tile * tile_s                         # one f32 (Ct, Ts) plane
    pipelined = 2 * blk * (2 * N + 3)                 # dbl-buffered x/out (N rows)
                                                      # + noise/mean/std (1 row)
    temps = blk * (N + 6)                             # (x-m), a, b, var/s/inv_s
    return pipelined + temps


def _vmem_config():
    """(tile budget, vmem_limit_bytes) picked per TPU generation."""
    cap = 128 << 20
    try:
        info = pltpu.get_tpu_info()
        cap = int(getattr(info, "vmem_capacity_bytes", cap) or cap)
    except Exception:
        pass
    if cap <= (64 << 20):                             # v7x-class: 64 MiB / TC
        return 24 << 20, 40 << 20
    return 48 << 20, 64 << 20                         # v5e / v6e: 128 MiB


def _choose_tiles(N, C, HW, budget_bytes):
    """Pick (C_TILE, TILE_S): largest aligned blocks within the VMEM budget."""

    def fits(ct, ts):
        return _footprint_bytes(N, ct, ts) <= budget_bytes

    # 1) Full (C, HW) block: no partial tiles, fully contiguous DMAs.
    if fits(C, HW):
        c_tile, tile_s = C, HW
        # Megacore: split large problems so both TensorCores get work,
        # keeping both halves (8,128)-aligned.
        if 4 * N * C * HW >= (4 << 20):
            if HW % 256 == 0:
                tile_s = HW // 2
            elif C % 16 == 0:
                c_tile = C // 2
        return c_tile, tile_s

    # 2) Keep the spatial axis whole (contiguous HBM slices); tile channels
    #    in multiples of 8, preferring tile sizes that divide C exactly.
    if C > 8 and fits(8, HW):
        best_any, best_div = 8, None
        ct = 8
        while ct <= C and fits(ct, HW):
            best_any = ct
            if C % ct == 0:
                best_div = ct
            ct += 8
        if best_div is not None and 2 * best_div >= best_any:
            return best_div, HW
        return best_any, HW

    # 3) Tile both axes: lane-dense 128-aligned spatial tiles.
    c_tile = min(C, 8)
    if HW <= 128:
        return c_tile, HW
    tile_s = (HW // 128) * 128
    while tile_s > 128 and not fits(c_tile, tile_s):
        tile_s -= 128
    if HW % 128 == 0:
        # Snap to a divisor of HW so every block is full (no masked tail).
        k = HW // 128
        best_d, d = 1, 1
        while d * d <= k:
            if k % d == 0:
                for cand in (d, k // d):
                    if 128 * cand <= tile_s:
                        best_d = max(best_d, cand)
            d += 1
        tile_s = 128 * best_d
    return c_tile, min(tile_s, HW)


def spatial_bn_forward(x, noise, offset, scale):
    """Train-mode forward of SpatialBN (first call: memories are None).

    Args:
      x:      (N, C, H, W) float32, N >= 2 (unbiased std over the batch)
      noise:  (1, C, H, W) float32 standard-normal draws (scaled by 0.05*std
              in-kernel, broadcast over the batch dimension)
      offset: (C,) float32
      scale:  (C,) float32
    Returns:
      out:      (N, C, H, W) normalized output
      mean_mem: (1, C, H, W) batch mean   (== mean_memory / train_mean)
      std_mem:  (1, C, H, W) batch std+1e-8 (== std_memory / train_std)
    """
    N, C, H, W = x.shape
    if N < 2:
        raise ValueError("SpatialBN requires batch >= 2 (unbiased std over batch).")
    HW = H * W

    x2 = x.astype(jnp.float32).reshape(N, C, HW)
    noise2 = noise.astype(jnp.float32).reshape(1, C, HW)

    # scale = len(scale) * scale / sum(scale)  -- cheap glue in plain JAX.
    scale_f = scale.astype(jnp.float32)
    scale_norm = (C * scale_f / jnp.sum(scale_f)).reshape(C, 1)
    offset2 = offset.astype(jnp.float32).reshape(C, 1)

    budget_bytes, vmem_limit = _vmem_config()
    c_tile, tile_s = _choose_tiles(N, C, HW, budget_bytes)
    grid = (pl.cdiv(C, c_tile), pl.cdiv(HW, tile_s))

    out_shapes = (
        jax.ShapeDtypeStruct((N, C, HW), jnp.float32),
        jax.ShapeDtypeStruct((1, C, HW), jnp.float32),
        jax.ShapeDtypeStruct((1, C, HW), jnp.float32),
    )

    out, mean_mem, std_mem = pl.pallas_call(
        spatial_bn_kernel,
        out_shape=out_shapes,
        grid_spec=pl.GridSpec(
            grid=grid,
            in_specs=[
                pl.BlockSpec((c_tile, 1), lambda ci, si: (ci, 0)),              # offset
                pl.BlockSpec((c_tile, 1), lambda ci, si: (ci, 0)),              # scale_norm
                pl.BlockSpec((N, c_tile, tile_s), lambda ci, si: (0, ci, si)),  # x
                pl.BlockSpec((1, c_tile, tile_s), lambda ci, si: (0, ci, si)),  # noise
            ],
            out_specs=(
                pl.BlockSpec((N, c_tile, tile_s), lambda ci, si: (0, ci, si)),  # out
                pl.BlockSpec((1, c_tile, tile_s), lambda ci, si: (0, ci, si)),  # mean
                pl.BlockSpec((1, c_tile, tile_s), lambda ci, si: (0, ci, si)),  # std
            ),
        ),
        compiler_params=pltpu.CompilerParams(
            dimension_semantics=("parallel", "parallel"),
            vmem_limit_bytes=int(vmem_limit)),
    )(offset2, scale_norm, x2, noise2)

    return (out.reshape(N, C, H, W),
            mean_mem.reshape(1, C, H, W),
            std_mem.reshape(1, C, H, W))


# TODO(synk): eval-mode path (uses stored mean_memory/std_memory) and the
# exponential-moving-average memory updates for calls > 1 are stateful
# host-side bookkeeping; the kernel returns (mean, std) so a caller can
# maintain that state, but the EMA blending itself is not in the kernel.


def _reference(x, noise, offset, scale):
    N, C, H, W = x.shape
    m = jnp.mean(x, axis=0, keepdims=True)
    s = jnp.sqrt(jnp.sum((x - m) ** 2, axis=0, keepdims=True) / (N - 1)) + 1e-8
    x_noisy = x + noise * (s * 0.05)
    scale_norm = C * scale / jnp.sum(scale)
    out = (offset.reshape(1, C, 1, 1)
           + scale_norm.reshape(1, C, 1, 1) * (x_noisy - m) / s)
    return out, m, s


if __name__ == "__main__":
    key = jax.random.PRNGKey(0)

    def run_case(k, N, C, H, W):
        kx, kn = jax.random.split(k)
        x = jax.random.normal(kx, (N, C, H, W), dtype=jnp.float32)
        # torch.normal(0, s*0.05, ...) replaced by externally sampled standard
        # normal (shape of the std tensor, broadcast over batch), scaled in-kernel.
        noise = jax.random.normal(kn, (1, C, H, W), dtype=jnp.float32)
        # Deterministic parameter init, matching the module's __init__:
        offset = jnp.zeros((C,), dtype=jnp.float32)   # [0.0] * channels
        scale = jnp.ones((C,), dtype=jnp.float32)     # [1.0] * channels

        out, mean_mem, std_mem = spatial_bn_forward(x, noise, offset, scale)
        jax.block_until_ready(out)

        ref_out, ref_m, ref_s = _reference(x, noise, offset, scale)
        assert jnp.allclose(out, ref_out, atol=1e-4, rtol=1e-4)
        assert jnp.allclose(mean_mem, ref_m, atol=1e-5, rtol=1e-5)
        assert jnp.allclose(std_mem, ref_s, atol=1e-5, rtol=1e-5)

    k1, k2 = jax.random.split(key)
    # Small shape consistent with the module (batch=2, channels=4, 16x16).
    run_case(k1, 2, 4, 16, 16)
    # Non-multiple-of-(8,128) dims: handled with full-dim blocks (no padding).
    run_case(k2, 3, 12, 10, 20)

    print("KERNEL_OK")
</pallas_src>

<mosaic_0001>
module attributes {stable_mosaic.version = 11 : i64} {
  func.func @spatial_bn_kernel(%arg0: i32, %arg1: i32, %arg2: memref<4x1xf32, #tpu.memory_space<vmem>>, %arg3: memref<4x1xf32, #tpu.memory_space<vmem>>, %arg4: memref<2x4x256xf32, #tpu.memory_space<vmem>>, %arg5: memref<1x4x256xf32, #tpu.memory_space<vmem>>, %arg6: memref<2x4x256xf32, #tpu.memory_space<vmem>>, %arg7: memref<1x4x256xf32, #tpu.memory_space<vmem>>, %arg8: memref<1x4x256xf32, #tpu.memory_space<vmem>>) attributes {dimension_semantics = [#tpu.dimension_semantics<parallel>, #tpu.dimension_semantics<parallel>], iteration_bounds = array<i64: 1, 1>, scalar_prefetch = 0 : i64, scratch_operands = 0 : i64, tpu.core_type = #tpu.core_type<tc>, window_params = [{transform_indices = @transform_0, window_bounds = array<i64: 4, 1>}, {transform_indices = @transform_1, window_bounds = array<i64: 4, 1>}, {transform_indices = @transform_2, window_bounds = array<i64: 2, 4, 256>}, {transform_indices = @transform_3, window_bounds = array<i64: 1, 4, 256>}, {transform_indices = @transform_4, window_bounds = array<i64: 2, 4, 256>}, {transform_indices = @transform_5, window_bounds = array<i64: 1, 4, 256>}, {transform_indices = @transform_6, window_bounds = array<i64: 1, 4, 256>}]} {
    %c0 = arith.constant 0 : index
    %c0_0 = arith.constant 0 : index
    %c0_1 = arith.constant 0 : index
    %0 = vector.load %arg4[%c0, %c0_0, %c0_1] : memref<2x4x256xf32, #tpu.memory_space<vmem>>, vector<2x4x256xf32>
    %cst = arith.constant dense<0.000000e+00> : vector<4x256xf32>
    %1 = vector.multi_reduction <add>, %0, %cst [0] : vector<2x4x256xf32> to vector<4x256xf32>
    %2 = vector.shape_cast %1 : vector<4x256xf32> to vector<1x4x256xf32>
    %cst_2 = arith.constant 2.000000e+00 : f32
    %3 = vector.broadcast %cst_2 : f32 to vector<1x4x256xf32>
    %4 = arith.divf %2, %3 : vector<1x4x256xf32>
    %5 = vector.broadcast %4 : vector<1x4x256xf32> to vector<2x4x256xf32>
    %6 = arith.subf %0, %5 : vector<2x4x256xf32>
    %7 = arith.mulf %6, %6 : vector<2x4x256xf32>
    %cst_3 = arith.constant dense<0.000000e+00> : vector<4x256xf32>
    %8 = vector.multi_reduction <add>, %7, %cst_3 [0] : vector<2x4x256xf32> to vector<4x256xf32>
    %9 = vector.shape_cast %8 : vector<4x256xf32> to vector<1x4x256xf32>
    %cst_4 = arith.constant 1.000000e+00 : f32
    %10 = vector.broadcast %cst_4 : f32 to vector<1x4x256xf32>
    %11 = arith.mulf %9, %10 : vector<1x4x256xf32>
    %12 = math.sqrt %11 : vector<1x4x256xf32>
    %cst_5 = arith.constant 9.99999993E-9 : f32
    %13 = vector.broadcast %cst_5 : f32 to vector<1x4x256xf32>
    %14 = arith.addf %12, %13 : vector<1x4x256xf32>
    %cst_6 = arith.constant 1.000000e+00 : f32
    %15 = vector.broadcast %cst_6 : f32 to vector<1x4x256xf32>
    %16 = arith.divf %15, %14 : vector<1x4x256xf32>
    %c0_7 = arith.constant 0 : index
    %c0_8 = arith.constant 0 : index
    %17 = vector.load %arg2[%c0_7, %c0_8] : memref<4x1xf32, #tpu.memory_space<vmem>>, vector<4x1xf32>
    %18 = vector.shape_cast %17 : vector<4x1xf32> to vector<1x4x1xf32>
    %c0_9 = arith.constant 0 : index
    %c0_10 = arith.constant 0 : index
    %19 = vector.load %arg3[%c0_9, %c0_10] : memref<4x1xf32, #tpu.memory_space<vmem>>, vector<4x1xf32>
    %20 = vector.shape_cast %19 : vector<4x1xf32> to vector<1x4x1xf32>
    %21 = vector.broadcast %20 : vector<1x4x1xf32> to vector<1x4x256xf32>
    %22 = arith.mulf %21, %16 : vector<1x4x256xf32>
    %cst_11 = arith.constant 5.000000e-02 : f32
    %23 = vector.broadcast %cst_11 : f32 to vector<1x4x1xf32>
    %24 = arith.mulf %23, %20 : vector<1x4x1xf32>
    %c0_12 = arith.constant 0 : index
    %c0_13 = arith.constant 0 : index
    %c0_14 = arith.constant 0 : index
    %25 = vector.load %arg5[%c0_12, %c0_13, %c0_14] : memref<1x4x256xf32, #tpu.memory_space<vmem>>, vector<1x4x256xf32>
    %26 = vector.broadcast %24 : vector<1x4x1xf32> to vector<1x4x256xf32>
    %27 = arith.mulf %26, %25 : vector<1x4x256xf32>
    %28 = vector.broadcast %18 : vector<1x4x1xf32> to vector<1x4x256xf32>
    %29 = arith.addf %28, %27 : vector<1x4x256xf32>
    %30 = arith.mulf %22, %4 : vector<1x4x256xf32>
    %31 = arith.subf %29, %30 : vector<1x4x256xf32>
    %32 = vector.broadcast %22 : vector<1x4x256xf32> to vector<2x4x256xf32>
    %33 = arith.mulf %32, %0 : vector<2x4x256xf32>
    %34 = vector.broadcast %31 : vector<1x4x256xf32> to vector<2x4x256xf32>
    %35 = arith.addf %33, %34 : vector<2x4x256xf32>
    %c0_15 = arith.constant 0 : index
    %c0_16 = arith.constant 0 : index
    %c0_17 = arith.constant 0 : index
    %36 = vector.load %arg6[%c0_15, %c0_16, %c0_17] : memref<2x4x256xf32, #tpu.memory_space<vmem>>, vector<2x4x256xf32>
    tpu.vector_store %arg6[%c0_15, %c0_16, %c0_17], %35 {strides = array<i32>} : memref<2x4x256xf32, #tpu.memory_space<vmem>>, vector<2x4x256xf32>,
    %c0_18 = arith.constant 0 : index
    %c0_19 = arith.constant 0 : index
    %c0_20 = arith.constant 0 : index
    %37 = vector.load %arg7[%c0_18, %c0_19, %c0_20] : memref<1x4x256xf32, #tpu.memory_space<vmem>>, vector<1x4x256xf32>
    tpu.vector_store %arg7[%c0_18, %c0_19, %c0_20], %4 {strides = array<i32>} : memref<1x4x256xf32, #tpu.memory_space<vmem>>, vector<1x4x256xf32>,
    %c0_21 = arith.constant 0 : index
    %c0_22 = arith.constant 0 : index
    %c0_23 = arith.constant 0 : index
    %38 = vector.load %arg8[%c0_21, %c0_22, %c0_23] : memref<1x4x256xf32, #tpu.memory_space<vmem>>, vector<1x4x256xf32>
    tpu.vector_store %arg8[%c0_21, %c0_22, %c0_23], %14 {strides = array<i32>} : memref<1x4x256xf32, #tpu.memory_space<vmem>>, vector<1x4x256xf32>,
    return
  }
  func.func @transform_0(%arg0: i32, %arg1: i32) -> (i32, i32) {
    %c0_i32 = arith.constant 0 : i32
    %c0_i32_0 = arith.constant 0 : i32
    return %arg0, %c0_i32 : i32, i32
  }
  func.func @transform_1(%arg0: i32, %arg1: i32) -> (i32, i32) {
    %c0_i32 = arith.constant 0 : i32
    %c0_i32_0 = arith.constant 0 : i32
    return %arg0, %c0_i32 : i32, i32
  }
  func.func @transform_2(%arg0: i32, %arg1: i32) -> (i32, i32, i32) {
    %c0_i32 = arith.constant 0 : i32
    %c0_i32_0 = arith.constant 0 : i32
    return %c0_i32, %arg0, %arg1 : i32, i32, i32
  }
  func.func @transform_3(%arg0: i32, %arg1: i32) -> (i32, i32, i32) {
    %c0_i32 = arith.constant 0 : i32
    %c0_i32_0 = arith.constant 0 : i32
    return %c0_i32, %arg0, %arg1 : i32, i32, i32
  }
  func.func @transform_4(%arg0: i32, %arg1: i32) -> (i32, i32, i32) {
    %c0_i32 = arith.constant 0 : i32
    %c0_i32_0 = arith.constant 0 : i32
    return %c0_i32, %arg0, %arg1 : i32, i32, i32
  }
  func.func @transform_5(%arg0: i32, %arg1: i32) -> (i32, i32, i32) {
    %c0_i32 = arith.constant 0 : i32
    %c0_i32_0 = arith.constant 0 : i32
    return %c0_i32, %arg0, %arg1 : i32, i32, i32
  }
  func.func @transform_6(%arg0: i32, %arg1: i32) -> (i32, i32, i32) {
    %c0_i32 = arith.constant 0 : i32
    %c0_i32_0 = arith.constant 0 : i32
    return %c0_i32, %arg0, %arg1 : i32, i32, i32
  }
}

</mosaic_0001>

<llo_original>
// kernel: tpu_custom_call.1
$region0: #{tpu_custom_call.1}
  #allocation0 [shape = 'u32[]', space=smem, size = 0x4, offset = 0x4, fixed_abs, tag = 'smem constant byte address 0x4 - core index']
  #allocation1 [shape = 'u32[72,128]{1,0:T(1,128)}', space=vmem, size = 0x9000, scoped, tag = 'internal scratch']
  %s0 = inlined_call_operand.vmem [shape: f32[4,1], index: 0, kind: input, shape index: {}]
  %s1 = inlined_call_operand.vmem [shape: f32[4,1], index: 1, kind: input, shape index: {}]
  %s2 = inlined_call_operand.hbm [shape: f32[2,4,256], index: 2, kind: input, shape index: {}]
  %s3 = inlined_call_operand.vmem [shape: f32[1,4,256], index: 3, kind: input, shape index: {}]
  %s4 = inlined_call_operand.hbm [shape: f32[2,4,256], index: 4, kind: output, shape index: {0}]
  %s5 = inlined_call_operand.hbm [shape: f32[1,4,256], index: 5, kind: output, shape index: {1}]
  %s6 = inlined_call_operand.hbm [shape: f32[1,4,256], index: 6, kind: output, shape index: {2}]
  %7 = xla_tuple %s4, %s5, %s6
  %s8 = sld [smem:[#allocation0]]
  $region46: #{tpu_custom_call.1} parent=0
    _
  %s10 = ssub.s32 1, %s8
  %s11 = scalar_select 0, %s10, %s8
  $region1: #{tpu_custom_call.1} parent=0
    #allocation2 [shape = 'u8[8192]{0}', space=vmem, size = 0x2000, scoped, tag = 'input window, operand 2, single buffered']
    #allocation3 [shape = 's32[1]{0}', space=sflag, size = 0x4, scoped, tag = 'scoped memory for tpu_custom_call.1']
    #allocation4 [shape = 's32[1]{0}', space=sflag, size = 0x4, scoped, tag = 'scoped memory for tpu_custom_call.1']
    #allocation5 [shape = 'u8[8192]{0}', space=vmem, size = 0x2000, scoped, tag = 'output window, operand 0, single buffered']
    #allocation6 [shape = 'u8[4096]{0}', space=vmem, size = 0x1000, scoped, tag = 'output window, operand 1, single buffered']
    #allocation7 [shape = 's32[1]{0}', space=sflag, size = 0x4, scoped, tag = 'scoped memory for tpu_custom_call.1']
    #allocation8 [shape = 'u8[4096]{0}', space=vmem, size = 0x1000, scoped, tag = 'output window, operand 2, single buffered']
    %12 = vsyncpa [#allocation3], 0
    %13 = vsyncpa [#allocation4], 0
    %14 = vsyncpa [#allocation7], 0
    // Predicated region
    $region2: #{tpu_custom_call.1} parent=1 // pred_check
      _
    $region3: #{tpu_custom_call.1} parent=1 // pred_check_branch
      %16 = sbr.rel (0) target = $region5
    $region4: #{tpu_custom_call.1} parent=1 // pred_region
      _
    $region5: #{tpu_custom_call.1} parent=1 // pred_fallthru
      _
    // Predicated region
    $region6: #{tpu_custom_call.1} parent=1 // pred_check
      _
    $region7: #{tpu_custom_call.1} parent=1 // pred_check_branch
      %18 = sbr.rel (0) target = $region9
    $region8: #{tpu_custom_call.1} parent=1 // pred_region
      _
    $region9: #{tpu_custom_call.1} parent=1 // pred_fallthru
      _
    // Predicated region
    $region10: #{tpu_custom_call.1} parent=1 // pred_check
      _
    $region11: #{tpu_custom_call.1} parent=1 // pred_check_branch
      %20 = sbr.rel (0) target = $region13
    $region12: #{tpu_custom_call.1} parent=1 // pred_region
      %22 = vsyncadd [#allocation3], 0
      %s23 = sshll.u32 %s2, 4
      %s24 = int_to_ptr.hbm [resolvable:$true] %s23
      %s25 = sshll.u32 [#allocation2], 4
      %s26 = int_to_ptr.vmem [resolvable:$true] %s25
      %31 = dma.hbm_to_vmem [thread:$0]  %s24, 256, %s26, [#allocation3], 128, 128, 8
    $region13: #{tpu_custom_call.1} parent=1 // pred_fallthru
      _
    // Predicated region
    $region14: #{tpu_custom_call.1} parent=1 // pred_check
      _
    $region15: #{tpu_custom_call.1} parent=1 // pred_check_branch
      %33 = sbr.rel (0) target = $region17
    $region16: #{tpu_custom_call.1} parent=1 // pred_region
      _
    $region17: #{tpu_custom_call.1} parent=1 // pred_fallthru
      _
    // Predicated region
    $region18: #{tpu_custom_call.1} parent=1 // pred_check
      _
    $region19: #{tpu_custom_call.1} parent=1 // pred_check_branch
      %35 = sbr.rel (0) target = $region21
    $region20: #{tpu_custom_call.1} parent=1 // pred_region
      %37 = dma.done [#allocation3], 256
    $region21: #{tpu_custom_call.1} parent=1 // pred_fallthru
      _
    %v38 = vld [vmem:[#allocation2] sm:$0xff]
    %v39 = vld [vmem:[#allocation2 + $0x8] sm:$0xff]
    %42 = vst [vmem:[#allocation1] ss:$2 sm:$0xff] %v38
    %v43 = vld.sshfl [vmem:[#allocation1] sm:$0xff pattern:$0x75316420]
    %v44 = vld.sshfl [vmem:[#allocation1 + $0x8] sm:$0xff pattern:$0x75316420]
    %s45 = scalar_lea.vmem [#allocation1], 16
    %46 = vst [vmem:[%s45] ss:$2 sm:$0xff] %v39
    %v47 = vld.sshfl [vmem:[#allocation1 + $0x10] sm:$0xff pattern:$0x75316420]
    %v48 = vld.sshfl [vmem:[#allocation1 + $0x18] sm:$0xff pattern:$0x75316420]
    %vm53 = vcmask 1043456
    %v54 = vsel %vm53, %v43, 0.0
    %v55 = vsel %vm53, %v47, 0.0
    %v56 = vadd.f32 %v54, %v55
    %v57 = vsel %vm53, %v44, 0.0
    %v58 = vsel %vm53, %v48, 0.0
    %v59 = vadd.f32 %v57, %v58
    %v60 = vrcp.pop 2.0
    %v61 = vmul.f32 2.0, %v60
    %v62 = vsub.f32 1.0, %v61
    %v63 = vmul.f32 %v60, %v62
    %v64 = vadd.f32 %v60, %v63
    %vm65 = vweird.f32 %v60
    %v66 = vsel %vm65, %v60, %v64
    %v67 = vmul.f32 %v56, %v66
    %v68 = vmul.f32 %v59, %v66
    %v71 = vrot.slane %v68, 4
    %v72 = vsel %vm53, %v67, %v71
    %v74 = vsub.f32 %v38, %v72
    %v75 = vsub.f32 %v39, %v72
    %v76 = vmul.f32 %v74, %v74
    %v77 = vmul.f32 %v75, %v75
    %80 = vst [vmem:[#allocation1] ss:$2 sm:$0xff] %v76
    %v81 = vld.sshfl [vmem:[#allocation1] sm:$0xff pattern:$0x75316420]
    %v82 = vld.sshfl [vmem:[#allocation1 + $0x8] sm:$0xff pattern:$0x75316420]
    %s83 = scalar_lea.vmem [#allocation1], 16
    %84 = vst [vmem:[%s83] ss:$2 sm:$0xff] %v77
    %v85 = vld.sshfl [vmem:[#allocation1 + $0x10] sm:$0xff pattern:$0x75316420]
    %v86 = vld.sshfl [vmem:[#allocation1 + $0x18] sm:$0xff pattern:$0x75316420]
    %v91 = vsel %vm53, %v81, 0.0
    %v92 = vsel %vm53, %v85, 0.0
    %v93 = vadd.f32 %v91, %v92
    %v94 = vsel %vm53, %v82, 0.0
    %v95 = vsel %vm53, %v86, 0.0
    %v96 = vadd.f32 %v94, %v95
    %v97 = vrsqrt.pop %v93
    %v98 = vmul.f32 %v97, %v93
    %v99 = vmul.f32 %v98, %v97
    %v100 = vmul.f32 0.5, %v99
    %v101 = vsub.f32 1.5, %v100
    %v102 = vmul.f32 %v97, %v101
    %v103 = vmul.f32 %v93, %v102
    %vm104 = vcmp.eq.f32.partialorder %v93, inf
    %v105 = vsel %vm104, %v93, %v103
    %vm106 = vcmp.eq.f32.partialorder %v93, 0.0
    %v107 = vand.u32 %v93, 2147483648
    %v108 = vsel %vm106, %v107, %v105
    %v109 = vrsqrt.pop %v96
    %v110 = vmul.f32 %v109, %v96
    %v111 = vmul.f32 %v110, %v109
    %v112 = vmul.f32 0.5, %v111
    %v113 = vsub.f32 1.5, %v112
    %v114 = vmul.f32 %v109, %v113
    %v115 = vmul.f32 %v96, %v114
    %vm116 = vcmp.eq.f32.partialorder %v96, inf
    %v117 = vsel %vm116, %v96, %v115
    %vm118 = vcmp.eq.f32.partialorder %v96, 0.0
    %v119 = vand.u32 %v96, 2147483648
    %v120 = vsel %vm118, %v119, %v117
    %v121 = vadd.f32 %v108, 1e-08
    %v122 = vadd.f32 %v120, 1e-08
    %v123 = vrcp.pop %v121
    %v124 = vmul.f32 %v121, %v123
    %v125 = vsub.f32 1.0, %v124
    %v126 = vmul.f32 %v123, %v125
    %v127 = vadd.f32 %v123, %v126
    %vm128 = vweird.f32 %v121
    %vm129 = vweird.f32 %v123
    %vm130 = vmor %vm128, %vm129
    %v131 = vsel %vm130, %v123, %v127
    %v132 = vand.u32 2147483647, %v121
    %vm133 = vcmp.eq.f32.partialorder %v132, 8.507059e+37
    %v134 = vand.u32 %v121, 2147483648
    %v135 = vor.u32 1.1754944e-38, %v134
    %v136 = vsel %vm133, %v135, %v131
    %v137 = vmul.f32 1.0, %v136
    %v138 = vrcp.pop %v122
    %v139 = vmul.f32 %v122, %v138
    %v140 = vsub.f32 1.0, %v139
    %v141 = vmul.f32 %v138, %v140
    %v142 = vadd.f32 %v138, %v141
    %vm143 = vweird.f32 %v122
    %vm144 = vweird.f32 %v138
    %vm145 = vmor %vm143, %vm144
    %v146 = vsel %vm145, %v138, %v142
    %v147 = vand.u32 2147483647, %v122
    %vm148 = vcmp.eq.f32.partialorder %v147, 8.507059e+37
    %v149 = vand.u32 %v122, 2147483648
    %v150 = vor.u32 1.1754944e-38, %v149
    %v151 = vsel %vm148, %v150, %v146
    %v152 = vmul.f32 1.0, %v151
    %v153 = vld [vmem:[%s0] sm:$0xf]
    %v154 = vld [vmem:[%s1] sm:$0xf]
    %156 = vset.pattern.permute.xlu0 0
    %157 = vperm.xlu0 %156, %v154
    %v158 = vpop.permute.xlu0 %157
    %v160 = vmul.f32 %v158, %v137
    %v161 = vmul.f32 %v158, %v152
    %v162 = vmul.f32 %v154, 0.05
    %v163 = vld [vmem:[%s3] sm:$0xff]
    %165 = vset.pattern.permute.xlu0 0
    %166 = vperm.xlu0 %165, %v162
    %v167 = vpop.permute.xlu0 %166
    %170 = vst [vmem:[#allocation1] ss:$2 sm:$0xff] %v163
    %v171 = vld.sshfl [vmem:[#allocation1] sm:$0xff pattern:$0x75316420]
    %v172 = vld.sshfl [vmem:[#allocation1 + $0x8] sm:$0xff pattern:$0x75316420]
    %v175 = vmul.f32 %v167, %v171
    %v176 = vmul.f32 %v167, %v172
    %178 = vset.pattern.permute.xlu0 0
    %179 = vperm.xlu0 %178, %v153
    %v180 = vpop.permute.xlu0 %179
    %v182 = vadd.f32 %v180, %v175
    %v183 = vadd.f32 %v180, %v176
    %v184 = vmul.f32 %v160, %v67
    %v185 = vmul.f32 %v161, %v68
    %v186 = vsub.f32 %v182, %v184
    %v187 = vsub.f32 %v183, %v185
    %188 = vst [vmem:[#allocation1] ss:$2 sm:$0xff] %v38
    %v189 = vld.sshfl [vmem:[#allocation1] sm:$0xff pattern:$0x75316420]
    %v190 = vld.sshfl [vmem:[#allocation1 + $0x8] sm:$0xff pattern:$0x75316420]
    %s191 = scalar_lea.vmem [#allocation1], 16
    %192 = vst [vmem:[%s191] ss:$2 sm:$0xff] %v39
    %v193 = vld.sshfl [vmem:[#allocation1 + $0x10] sm:$0xff pattern:$0x75316420]
    %v194 = vld.sshfl [vmem:[#allocation1 + $0x18] sm:$0xff pattern:$0x75316420]
    %v199 = vmul.f32 %v160, %v189
    %v200 = vmul.f32 %v161, %v190
    %v201 = vmul.f32 %v160, %v193
    %v202 = vmul.f32 %v161, %v194
    %v203 = vadd.f32 %v199, %v186
    %v204 = vadd.f32 %v200, %v187
    %v205 = vadd.f32 %v201, %v186
    %v206 = vadd.f32 %v202, %v187
    %v211 = vrot.slane %v204, 4
    %v212 = vrot.slane %v206, 4
    %v213 = vsel %vm53, %v203, %v211
    %v214 = vsel %vm53, %v205, %v212
    %217 = vst [vmem:[#allocation5] sm:$0xff] %v213
    %218 = vst [vmem:[#allocation5 + $0x8] sm:$0xff] %v214
    %219 = vst [vmem:[#allocation6] sm:$0xff] %v72
    %v222 = vrot.slane %v122, 4
    %v223 = vsel %vm53, %v121, %v222
    %225 = vst [vmem:[#allocation8] sm:$0xff] %v223
    // Predicated region
    $region22: #{tpu_custom_call.1} parent=1 // pred_check
      _
    $region23: #{tpu_custom_call.1} parent=1 // pred_check_branch
      %227 = sbr.rel (0) target = $region25
    $region24: #{tpu_custom_call.1} parent=1 // pred_region
      %229 = vsyncadd [#allocation4], 0
      %s230 = sshll.u32 [#allocation5], 4
      %s231 = int_to_ptr.vmem [resolvable:$true] %s230
      %s232 = sshll.u32 %s4, 4
      %s233 = int_to_ptr.hbm [resolvable:$true] %s232
      %238 = dma.vmem_to_hbm [thread:$0]  %s231, 256, %s233, [#allocation4], 128, 128, 8
    $region25: #{tpu_custom_call.1} parent=1 // pred_fallthru
      _
    // Predicated region
    $region26: #{tpu_custom_call.1} parent=1 // pred_check
      _
    $region27: #{tpu_custom_call.1} parent=1 // pred_check_branch
      %240 = sbr.rel (0) target = $region29
    $region28: #{tpu_custom_call.1} parent=1 // pred_region
      %242 = vsyncadd [#allocation7], 0
      %s244 = sshll.u32 [#allocation6], 4
      %s245 = int_to_ptr.vmem [resolvable:$true] %s244
      %s246 = sshll.u32 %s5, 4
      %s247 = int_to_ptr.hbm [resolvable:$true] %s246
      %249 = dma.vmem_to_hbm [thread:$0]  %s245, 128, %s247, [#allocation7]
    $region29: #{tpu_custom_call.1} parent=1 // pred_fallthru
      _
    // Predicated region
    $region30: #{tpu_custom_call.1} parent=1 // pred_check
      _
    $region31: #{tpu_custom_call.1} parent=1 // pred_check_branch
      %251 = sbr.rel (0) target = $region33
    $region32: #{tpu_custom_call.1} parent=1 // pred_region
      %253 = vsyncadd [#allocation7], 0
      %s255 = sshll.u32 [#allocation8], 4
      %s256 = int_to_ptr.vmem [resolvable:$true] %s255
      %s257 = sshll.u32 %s6, 4
      %s258 = int_to_ptr.hbm [resolvable:$true] %s257
      %260 = dma.vmem_to_hbm [thread:$0]  %s256, 128, %s258, [#allocation7]
    $region33: #{tpu_custom_call.1} parent=1 // pred_fallthru
      _
    // Predicated region
    $region34: #{tpu_custom_call.1} parent=1 // pred_check
      _
    $region35: #{tpu_custom_call.1} parent=1 // pred_check_branch
      %262 = sbr.rel (0) target = $region37
    $region36: #{tpu_custom_call.1} parent=1 // pred_region
      %264 = dma.done [#allocation4], 256
    $region37: #{tpu_custom_call.1} parent=1 // pred_fallthru
      _
    // Predicated region
    $region38: #{tpu_custom_call.1} parent=1 // pred_check
      _
    $region39: #{tpu_custom_call.1} parent=1 // pred_check_branch
      %266 = sbr.rel (0) target = $region41
    $region40: #{tpu_custom_call.1} parent=1 // pred_region
      %268 = dma.done [#allocation7], 128
    $region41: #{tpu_custom_call.1} parent=1 // pred_fallthru
      _
    // Predicated region
    $region42: #{tpu_custom_call.1} parent=1 // pred_check
      _
    $region43: #{tpu_custom_call.1} parent=1 // pred_check_branch
      %270 = sbr.rel (0) target = $region45
    $region44: #{tpu_custom_call.1} parent=1 // pred_region
      %272 = dma.done [#allocation7], 128
    $region45: #{tpu_custom_call.1} parent=1 // pred_fallthru
      _
    %273 = vsyncpa [#allocation3], 1
    %274 = vsyncpa [#allocation4], 1
    %275 = vsyncpa [#allocation7], 1

</llo_original>
